<compile_context>
chip_gen: v6e
topology: v6e:2x2x1
jax: 0.10.0
libtpu: 0.0.40
codegen_flags: <defaults>
</compile_context>

<pallas_src>
import functools

import jax
import jax.numpy as jnp
from jax import lax
from jax.experimental import pallas as pl
from jax.experimental.pallas import tpu as pltpu


def _mi_kernel(at_ref, bt_ref, o_ref, acc_ref, *, inv_n, scaler):
    pid = pl.program_id(0)

    @pl.when(pid == 0)
    def _init():
        acc_ref[...] = jnp.zeros_like(acc_ref)

    # Lane-dense tiles: (b, tn) and (c, tn); contract over the lane (sample)
    # axis directly -- no explicit transpose / XLU relayout before the MXU.
    a_t = at_ref[...]
    b_t = bt_ref[...]
    acc_ref[...] += lax.dot_general(
        a_t,
        b_t,
        dimension_numbers=(((1,), (1,)), ((), ())),
        preferred_element_type=jnp.float32,
    )

    # Epilogue: run once, on the final tile only.
    @pl.when(pid == pl.num_programs(0) - 1)
    def _epilogue():
        joint = acc_ref[...] * jnp.float32(inv_n)          # (b, c)
        marg_a = jnp.sum(joint, axis=1, keepdims=True)     # (b, 1)
        marg_b = jnp.sum(joint, axis=0, keepdims=True)     # (1, c)
        eps = jnp.float32(1e-10)
        outer = marg_a * marg_b                            # == marg_a @ marg_b
        mi = jnp.sum(joint * jnp.log(joint / (outer + eps) + eps))
        o_ref[...] = (jnp.float32(scaler) * mi).reshape(1, 1)


def independence_loss_between_matrix(prob_a, prob_b, scaler=1.0, tile_n=8192):
    """Pallas-TPU implementation of IndependenceLoss_between_matrix.forward."""
    n, bdim = prob_a.shape
    n2, cdim = prob_b.shape
    assert n == n2, "prob_a and prob_b must share the leading (sample) dimension"

    # Lane-dense layout: categories on sublanes, samples on lanes.
    at = prob_a.T        # (b, n)
    bt = prob_b.T        # (c, n)

    # Lane tile: a multiple of 128, capped at tile_n; pad n with zero columns
    # (zero columns contribute exactly 0 to the contraction; we divide by the
    # true n inside the kernel).
    n_ceil128 = ((n + 127) // 128) * 128
    tn = min(int(tile_n), n_ceil128)
    tn = max(128, (tn // 128) * 128)
    n_pad = ((n + tn - 1) // tn) * tn
    if n_pad != n:
        at = jnp.pad(at, ((0, 0), (0, n_pad - n)))
        bt = jnp.pad(bt, ((0, 0), (0, n_pad - n)))
    grid_n = n_pad // tn

    kernel = functools.partial(_mi_kernel, inv_n=1.0 / n, scaler=float(scaler))

    out = pl.pallas_call(
        kernel,
        out_shape=jax.ShapeDtypeStruct((1, 1), jnp.float32),
        grid_spec=pltpu.PrefetchScalarGridSpec(
            num_scalar_prefetch=0,
            grid=(grid_n,),
            in_specs=[
                pl.BlockSpec((bdim, tn), lambda i: (0, i)),
                pl.BlockSpec((cdim, tn), lambda i: (0, i)),
            ],
            out_specs=pl.BlockSpec((1, 1), lambda i: (0, 0)),
            scratch_shapes=[pltpu.VMEM((bdim, cdim), jnp.float32)],
        ),
        compiler_params=pltpu.CompilerParams(
            dimension_semantics=("arbitrary",),   # n-axis is a reduction
        ),
    )(at, bt)
    # TODO(synk): on v7x the n-reduction could additionally be split across the
    # two TensorCores (private partial joints + tiny combine epilogue).
    return out[0, 0]


def _reference(prob_a, prob_b, scaler=1.0):
    # Pure-JAX reference mirroring the PyTorch forward exactly.
    n = prob_a.shape[0]
    joint = jnp.dot(prob_a.T, prob_b, preferred_element_type=jnp.float32) / n
    marg_a = joint.sum(axis=1, keepdims=True)
    marg_b = joint.sum(axis=0, keepdims=True)
    eps = 1e-10
    mi = jnp.sum(joint * jnp.log(joint / (marg_a @ marg_b + eps) + eps))
    return scaler * mi


if __name__ == "__main__":
    key = jax.random.PRNGKey(0)
    k1, k2, k3, k4 = jax.random.split(key, 4)

    # Case 1: small shapes consistent with the module (n samples, b/c categories).
    n, b, c = 64, 8, 16
    prob_a = jax.nn.softmax(jax.random.normal(k1, (n, b), dtype=jnp.float32), axis=-1)
    prob_b = jax.nn.softmax(jax.random.normal(k2, (n, c), dtype=jnp.float32), axis=-1)

    scaler = 1.0
    loss = jax.block_until_ready(independence_loss_between_matrix(prob_a, prob_b, scaler))
    ref = jax.block_until_ready(_reference(prob_a, prob_b, scaler))
    assert jnp.allclose(loss, ref, atol=1e-4, rtol=1e-4), (loss, ref)

    # Case 2: ragged n with a multi-step grid (exercises accumulator + padding +
    # last-iteration epilogue gating).
    n2_, b2_, c2_ = 1000, 8, 16
    prob_a2 = jax.nn.softmax(jax.random.normal(k3, (n2_, b2_), dtype=jnp.float32), axis=-1)
    prob_b2 = jax.nn.softmax(jax.random.normal(k4, (n2_, c2_), dtype=jnp.float32), axis=-1)
    loss2 = jax.block_until_ready(
        independence_loss_between_matrix(prob_a2, prob_b2, 0.5, tile_n=256))
    ref2 = jax.block_until_ready(_reference(prob_a2, prob_b2, 0.5))
    assert jnp.allclose(loss2, ref2, atol=1e-4, rtol=1e-4), (loss2, ref2)

    print("KERNEL_OK")
</pallas_src>

<mosaic_0001>
module attributes {stable_mosaic.version = 11 : i64} {
  func.func @_mi_kernel(%arg0: i32, %arg1: memref<8x128xf32, #tpu.memory_space<vmem>>, %arg2: memref<16x128xf32, #tpu.memory_space<vmem>>, %arg3: memref<1x1xf32, #tpu.memory_space<vmem>>, %arg4: memref<8x16xf32, #tpu.memory_space<vmem>>) attributes {dimension_semantics = [#tpu.dimension_semantics<arbitrary>], iteration_bounds = array<i64: 1>, scalar_prefetch = 0 : i64, scratch_operands = 1 : i64, tpu.core_type = #tpu.core_type<tc>, window_params = [{transform_indices = @transform_0, window_bounds = array<i64: 8, 128>}, {transform_indices = @transform_1, window_bounds = array<i64: 16, 128>}, {pipeline_mode = #tpu.pipeline_mode<synchronous>, transform_indices = @transform_2, window_bounds = array<i64: 1, 1>}]} {
    %c0_i32 = arith.constant 0 : i32
    %0 = arith.cmpi eq, %arg0, %c0_i32 : i32
    %1 = arith.extui %0 : i1 to i32
    %c0_i32_0 = arith.constant 0 : i32
    %2 = arith.cmpi ne, %1, %c0_i32_0 : i32
    scf.if %2 {
      %cst_10 = arith.constant 0.000000e+00 : f32
      %12 = vector.broadcast %cst_10 : f32 to vector<8x16xf32>
      %c0_11 = arith.constant 0 : index
      %c0_12 = arith.constant 0 : index
      %13 = vector.load %arg4[%c0_11, %c0_12] : memref<8x16xf32, #tpu.memory_space<vmem>>, vector<8x16xf32>
      tpu.vector_store %arg4[%c0_11, %c0_12], %12 {strides = array<i32>} : memref<8x16xf32, #tpu.memory_space<vmem>>, vector<8x16xf32>,
    } else {
    }
    %c0 = arith.constant 0 : index
    %c0_1 = arith.constant 0 : index
    %3 = vector.load %arg1[%c0, %c0_1] : memref<8x128xf32, #tpu.memory_space<vmem>>, vector<8x128xf32>
    %c0_2 = arith.constant 0 : index
    %c0_3 = arith.constant 0 : index
    %4 = vector.load %arg2[%c0_2, %c0_3] : memref<16x128xf32, #tpu.memory_space<vmem>>, vector<16x128xf32>
    %c0_4 = arith.constant 0 : index
    %c0_5 = arith.constant 0 : index
    %5 = vector.load %arg4[%c0_4, %c0_5] : memref<8x16xf32, #tpu.memory_space<vmem>>, vector<8x16xf32>
    %cst = arith.constant dense<0.000000e+00> : vector<8x16xf32>
    %6 = tpu.matmul %3, %4, %cst {dimension_numbers = #tpu.dot_dimension_numbers<[1], [1], [0], [0], [0, 0, 1, 0], [], []>} : vector<8x128xf32>, vector<16x128xf32>, vector<8x16xf32> -> vector<8x16xf32>
    %7 = arith.addf %5, %6 : vector<8x16xf32>
    %c0_6 = arith.constant 0 : index
    %c0_7 = arith.constant 0 : index
    %8 = vector.load %arg4[%c0_6, %c0_7] : memref<8x16xf32, #tpu.memory_space<vmem>>, vector<8x16xf32>
    tpu.vector_store %arg4[%c0_6, %c0_7], %7 {strides = array<i32>} : memref<8x16xf32, #tpu.memory_space<vmem>>, vector<8x16xf32>,
    %c0_i32_8 = arith.constant 0 : i32
    %9 = arith.cmpi eq, %arg0, %c0_i32_8 : i32
    %10 = arith.extui %9 : i1 to i32
    %c0_i32_9 = arith.constant 0 : i32
    %11 = arith.cmpi ne, %10, %c0_i32_9 : i32
    scf.if %11 {
      %c0_10 = arith.constant 0 : index
      %c0_11 = arith.constant 0 : index
      %12 = vector.load %arg4[%c0_10, %c0_11] : memref<8x16xf32, #tpu.memory_space<vmem>>, vector<8x16xf32>
      %cst_12 = arith.constant 1.562500e-02 : f32
      %13 = vector.broadcast %cst_12 : f32 to vector<8x16xf32>
      %14 = arith.mulf %12, %13 : vector<8x16xf32>
      %cst_13 = arith.constant dense<0.000000e+00> : vector<8xf32>
      %15 = vector.multi_reduction <add>, %14, %cst_13 [1] : vector<8x16xf32> to vector<8xf32>
      %16 = vector.shape_cast %15 : vector<8xf32> to vector<8x1xf32>
      %cst_14 = arith.constant dense<0.000000e+00> : vector<16xf32>
      %17 = vector.multi_reduction <add>, %14, %cst_14 [0] : vector<8x16xf32> to vector<16xf32>
      %18 = vector.shape_cast %17 : vector<16xf32> to vector<1x16xf32>
      %19 = vector.broadcast %16 : vector<8x1xf32> to vector<8x16xf32>
      %20 = vector.broadcast %18 : vector<1x16xf32> to vector<8x16xf32>
      %21 = arith.mulf %19, %20 : vector<8x16xf32>
      %cst_15 = arith.constant 1.000000e-10 : f32
      %22 = vector.broadcast %cst_15 : f32 to vector<8x16xf32>
      %23 = arith.addf %21, %22 : vector<8x16xf32>
      %24 = arith.divf %14, %23 : vector<8x16xf32>
      %cst_16 = arith.constant 1.000000e-10 : f32
      %25 = vector.broadcast %cst_16 : f32 to vector<8x16xf32>
      %26 = arith.addf %24, %25 : vector<8x16xf32>
      %27 = math.log %26 : vector<8x16xf32>
      %28 = arith.mulf %14, %27 : vector<8x16xf32>
      %29 = vector.shape_cast %28 : vector<8x16xf32> to vector<1x8x16xf32>
      %cst_17 = arith.constant dense<0.000000e+00> : vector<1xf32>
      %30 = vector.multi_reduction <add>, %29, %cst_17 [1, 2] : vector<1x8x16xf32> to vector<1xf32>
      %31 = vector.shape_cast %30 : vector<1xf32> to vector<1x1x1xf32>
      %32 = vector.extract %31[0, 0, 0] : f32 from vector<1x1x1xf32>
      %cst_18 = arith.constant 1.000000e+00 : f32
      %33 = arith.mulf %cst_18, %32 : f32
      %34 = vector.broadcast %33 : f32 to vector<1x1xf32>
      %c0_19 = arith.constant 0 : index
      %c0_20 = arith.constant 0 : index
      %35 = vector.load %arg3[%c0_19, %c0_20] : memref<1x1xf32, #tpu.memory_space<vmem>>, vector<1x1xf32>
      tpu.vector_store %arg3[%c0_19, %c0_20], %34 {strides = array<i32>} : memref<1x1xf32, #tpu.memory_space<vmem>>, vector<1x1xf32>,
    } else {
    }
    return
  }
  func.func @transform_0(%arg0: i32) -> (i32, i32) {
    %c0_i32 = arith.constant 0 : i32
    %c0_i32_0 = arith.constant 0 : i32
    return %c0_i32, %arg0 : i32, i32
  }
  func.func @transform_1(%arg0: i32) -> (i32, i32) {
    %c0_i32 = arith.constant 0 : i32
    %c0_i32_0 = arith.constant 0 : i32
    return %c0_i32, %arg0 : i32, i32
  }
  func.func @transform_2(%arg0: i32) -> (i32, i32) {
    %c0_i32 = arith.constant 0 : i32
    %c0_i32_0 = arith.constant 0 : i32
    %c0_i32_1 = arith.constant 0 : i32
    return %c0_i32, %c0_i32_0 : i32, i32
  }
}

</mosaic_0001>

<llo_original>
// kernel: tpu_custom_call.1
$region0: #{tpu_custom_call.1}
  #allocation0 [shape = 'u32[]', space=smem, size = 0x4, offset = 0x4, fixed_abs, tag = 'smem constant byte address 0x4 - core index']
  #allocation1 [shape = 'u32[144,128]{1,0:T(1,128)}', space=vmem, size = 0x12000, scoped, tag = 'internal scratch']
  #allocation2 [shape = 'f32[8,16]{1,0:T(8,128)}', space=vmem, size = 0x1000, scoped, tag = 'scratch operand']
  %s0 = inlined_call_operand.hbm [shape: f32[8,128], index: 0, kind: input, shape index: {}]
  %s1 = inlined_call_operand.hbm [shape: f32[16,128], index: 1, kind: input, shape index: {}]
  %s2 = inlined_call_operand.hbm [shape: f32[1,1], index: 2, kind: output, shape index: {}]
  %s3 = sld [smem:[#allocation0]]
  $region34: #{tpu_custom_call.1} parent=0
    _
  %s5 = ssub.s32 1, %s3
  %s6 = scalar_select 0, %s5, %s3
  $region1: #{tpu_custom_call.1} parent=0
    #allocation3 [shape = 'u8[4096]{0}', space=vmem, size = 0x1000, scoped, tag = 'input window, operand 0, single buffered']
    #allocation4 [shape = 's32[1]{0}', space=sflag, size = 0x4, scoped, tag = 'scoped memory for tpu_custom_call.1']
    #allocation5 [shape = 's32[1]{0}', space=sflag, size = 0x4, scoped, tag = 'scoped memory for tpu_custom_call.1']
    #allocation6 [shape = 'u8[8192]{0}', space=vmem, size = 0x2000, scoped, tag = 'input window, operand 1, single buffered']
    #allocation7 [shape = 's32[1]{0}', space=sflag, size = 0x4, scoped, tag = 'scoped memory for tpu_custom_call.1']
    #allocation8 [shape = 'u8[512]{0}', space=vmem, size = 0x400, scoped, tag = 'output window, operand 0, single buffered']
    %7 = vsyncpa [#allocation4], 0
    %8 = vsyncpa [#allocation7], 0
    %9 = vsyncpa [#allocation5], 0
    // Predicated region
    $region2: #{tpu_custom_call.1} parent=1 // pred_check
      _
    $region3: #{tpu_custom_call.1} parent=1 // pred_check_branch
      %11 = sbr.rel (0) target = $region5
    $region4: #{tpu_custom_call.1} parent=1 // pred_region
      %s13 = ssub.s32 128, 128
      %14 = vsyncadd [#allocation4], %s13
      %s16 = sshll.u32 [#allocation3], 4
      %s17 = int_to_ptr.vmem [resolvable:$true] %s16
      %19 = dma.hbm_to_vmem [thread:$0]  %s0, 128, %s17, [#allocation4]
    $region5: #{tpu_custom_call.1} parent=1 // pred_fallthru
      _
    // Predicated region
    $region6: #{tpu_custom_call.1} parent=1 // pred_check
      _
    $region7: #{tpu_custom_call.1} parent=1 // pred_check_branch
      %21 = sbr.rel (0) target = $region9
    $region8: #{tpu_custom_call.1} parent=1 // pred_region
      %s23 = ssub.s32 256, 256
      %24 = vsyncadd [#allocation7], %s23
      %s25 = sshll.u32 [#allocation6], 4
      %s26 = int_to_ptr.vmem [resolvable:$true] %s25
      %31 = dma.hbm_to_vmem [thread:$0]  %s1, 256, %s26, [#allocation7], 128, 128, 8
    $region9: #{tpu_custom_call.1} parent=1 // pred_fallthru
      _
    // Predicated region
    $region10: #{tpu_custom_call.1} parent=1 // pred_check
      _
    $region11: #{tpu_custom_call.1} parent=1 // pred_check_branch
      %33 = sbr.rel (0) target = $region13
    $region12: #{tpu_custom_call.1} parent=1 // pred_region
      %34 = dma.done [#allocation4], 128
    $region13: #{tpu_custom_call.1} parent=1 // pred_fallthru
      _
    // Predicated region
    $region14: #{tpu_custom_call.1} parent=1 // pred_check
      _
    $region15: #{tpu_custom_call.1} parent=1 // pred_check_branch
      %36 = sbr.rel (0) target = $region17
    $region16: #{tpu_custom_call.1} parent=1 // pred_region
      %37 = dma.done [#allocation7], 256
    $region17: #{tpu_custom_call.1} parent=1 // pred_fallthru
      _
    %p38 = scmp.eq.s32.totalorder 0, 0
    // Predicated region
    $region18: #{tpu_custom_call.1} parent=1 // pred_check
      %p39 = pneg %p38
    $region19: #{tpu_custom_call.1} parent=1 // pred_check_branch
      %41 = sbr.rel (%p39) target = $region21
    $region20: #{tpu_custom_call.1} parent=1 // pred_region
      %vm42 = vcmask 130048
      %43 = vst.msk [vmem:[#allocation2] sm:$0xff] %vm42, 0.0
    $region21: #{tpu_custom_call.1} parent=1 // pred_fallthru
      _
    %v44 = vld [vmem:[#allocation3] sm:$0xff]
    %v45 = vld [vmem:[#allocation6] sm:$0xff]
    %v46 = vld [vmem:[#allocation6 + $0x8] sm:$0xff]
    %v47 = vld [vmem:[#allocation2] sm:$0xff]
    %48 = vmatprep.subr.mxu0 0.0
    %49 = vmatpush1.xpose.msra.mxu0 0.0
    %50 = vmatprep.subr.mxu0 0.0
    %51 = vmatpush1.xpose.msra.mxu0 0.0
    %52 = vmatprep.subr.mxu0 0.0
    %53 = vmatpush1.xpose.msra.mxu0 0.0
    %54 = vmatprep.subr.mxu0 0.0
    %55 = vmatpush1.xpose.msra.mxu0 0.0
    %56 = vmatprep.subr.mxu0 0.0
    %57 = vmatpush1.xpose.msra.mxu0 0.0
    %58 = vmatprep.subr.mxu0 0.0
    %59 = vmatpush1.xpose.msra.mxu0 0.0
    %60 = vmatprep.subr.mxu0 0.0
    %61 = vmatpush1.xpose.msra.mxu0 0.0
    %62 = vmatprep.subr.mxu0 0.0
    %63 = vmatpush1.xpose.msra.mxu0 0.0
    %64 = vmatprep.subr.mxu0 0.0
    %65 = vmatpush1.xpose.msra.mxu0 0.0
    %66 = vmatprep.subr.mxu0 0.0
    %67 = vmatpush1.xpose.msra.mxu0 0.0
    %68 = vmatprep.subr.mxu0 0.0
    %69 = vmatpush1.xpose.msra.mxu0 0.0
    %70 = vmatprep.subr.mxu0 0.0
    %71 = vmatpush1.xpose.msra.mxu0 0.0
    %72 = vmatprep.subr.mxu0 0.0
    %73 = vmatpush1.xpose.msra.mxu0 0.0
    %74 = vmatprep.subr.mxu0 0.0
    %75 = vmatpush1.xpose.msra.mxu0 0.0
    %76 = vmatprep.subr.mxu0 0.0
    %77 = vmatpush1.xpose.msra.mxu0 %v46
    %78 = vmatprep.subr.mxu0 0.0
    %79 = vmatpush1.xpose.msra.mxu0 %v45
    %80 = vmatprep.subr.mxu0 0.0
    %81 = vmatpush2.xpose.msra.mxu0 0.0
    %82 = vmatprep.subr.mxu0 0.0
    %83 = vmatpush2.xpose.msra.mxu0 0.0
    %84 = vmatprep.subr.mxu0 0.0
    %85 = vmatpush2.xpose.msra.mxu0 0.0
    %86 = vmatprep.subr.mxu0 0.0
    %87 = vmatpush2.xpose.msra.mxu0 0.0
    %88 = vmatprep.subr.mxu0 0.0
    %89 = vmatpush2.xpose.msra.mxu0 0.0
    %90 = vmatprep.subr.mxu0 0.0
    %91 = vmatpush2.xpose.msra.mxu0 0.0
    %92 = vmatprep.subr.mxu0 0.0
    %93 = vmatpush2.xpose.msra.mxu0 0.0
    %94 = vmatprep.subr.mxu0 0.0
    %95 = vmatpush2.xpose.msra.mxu0 0.0
    %96 = vmatprep.subr.mxu0 0.0
    %97 = vmatpush2.xpose.msra.mxu0 0.0
    %98 = vmatprep.subr.mxu0 0.0
    %99 = vmatpush2.xpose.msra.mxu0 0.0
    %100 = vmatprep.subr.mxu0 0.0
    %101 = vmatpush2.xpose.msra.mxu0 0.0
    %102 = vmatprep.subr.mxu0 0.0
    %103 = vmatpush2.xpose.msra.mxu0 0.0
    %104 = vmatprep.subr.mxu0 0.0
    %105 = vmatpush2.xpose.msra.mxu0 0.0
    %106 = vmatprep.subr.mxu0 0.0
    %107 = vmatpush2.xpose.msra.mxu0 0.0
    %108 = vmatprep.subr.mxu0 0.0
    %109 = vmatpush2.xpose.msra.mxu0 0.0
    %110 = vmatprep.subr.mxu0 0.0
    %111 = vmatpush2.xpose.msra.mxu0 0.0
    %112 = vmatprep.mubr.f32.mxu0 0.0
    %113 = vmatmul.mubr.f32.gmra.mxu0 %v44
    %v114 = vpop.f32.mrf.mxu0
    %v115 = vadd.f32 0.0, %v114
    %v116 = vpop.f32.mrf.mxu0
    %117 = vdwg.mxu0
    %v118 = vadd.f32 %v47, %v115
    %vm119 = vcmask 130048
    %120 = vst.msk [vmem:[#allocation2] sm:$0xff] %vm119, %v118
    // Predicated region
    $region22: #{tpu_custom_call.1} parent=1 // pred_check
      %p121 = pneg %p38
    $region23: #{tpu_custom_call.1} parent=1 // pred_check_branch
      %123 = sbr.rel (%p121) target = $region25
    $region24: #{tpu_custom_call.1} parent=1 // pred_region
      %v124 = vld [vmem:[#allocation2] sm:$0xff]
      %v125 = vmul.f32 %v124, 0.015625
      %v126 = vsel %vm119, %v125, 0.0
      %127 = vadd.xlane.f32.xlu0 %v126
      %v128 = vpop.xlane.xlu0 %127
      %v129 = vrot.slane %v126, 4
      %v130 = vadd.f32 %v126, %v129
      %v131 = vrot.slane %v130, 2
      %v132 = vadd.f32 %v130, %v131
      %v133 = vrot.slane %v132, 1
      %v134 = vadd.f32 %v132, %v133
      %v135 = vmul.f32 %v128, %v134
      %v136 = vadd.f32 %v135, 1e-10
      %v137 = vrcp.pop %v136
      %v138 = vmul.f32 %v125, %v137
      %v139 = vadd.f32 %v138, 1e-10
      %v140 = vlog2.pop %v139
      %v141 = vmul.f32 %v140, 0.6931472
      %v142 = vmul.f32 %v125, %v141
      %v143 = vsel %vm119, %v142, 0.0
      %144 = vadd.xlane.f32.xlu0 %v143
      %v145 = vpop.xlane.xlu0 %144
      %v146 = vrot.slane %v145, 4
      %v147 = vadd.f32 %v145, %v146
      %v148 = vrot.slane %v147, 2
      %v149 = vadd.f32 %v147, %v148
      %v150 = vrot.slane %v149, 1
      %v151 = vadd.f32 %v149, %v150
      %s152 = vtos %v151
      %v153 = vstv %s152
      %vm154 = vcmask 0
      %155 = vst.msk [vmem:[#allocation8] sm:$0x1] %vm154, %v153
    $region25: #{tpu_custom_call.1} parent=1 // pred_fallthru
      _
    // Predicated region
    $region26: #{tpu_custom_call.1} parent=1 // pred_check
      _
    $region27: #{tpu_custom_call.1} parent=1 // pred_check_branch
      %157 = sbr.rel (0) target = $region29
    $region28: #{tpu_custom_call.1} parent=1 // pred_region
      %s159 = ssub.s32 16, 16
      %160 = vsyncadd [#allocation5], %s159
      %s162 = sshll.u32 [#allocation8], 4
      %s163 = int_to_ptr.vmem [resolvable:$true] %s162
      %165 = dma.vmem_to_hbm [thread:$0]  %s163, 16, %s2, [#allocation5]
    $region29: #{tpu_custom_call.1} parent=1 // pred_fallthru
      _
    // Predicated region
    $region30: #{tpu_custom_call.1} parent=1 // pred_check
      _
    $region31: #{tpu_custom_call.1} parent=1 // pred_check_branch
      %167 = sbr.rel (0) target = $region33
    $region32: #{tpu_custom_call.1} parent=1 // pred_region
      %168 = dma.done [#allocation5], 16
    $region33: #{tpu_custom_call.1} parent=1 // pred_fallthru
      _
    %169 = vsyncpa [#allocation4], 1
    %170 = vsyncpa [#allocation7], 1
    %171 = vsyncpa [#allocation5], 1

</llo_original>
